<compile_context>
chip_gen: v7x
topology: tpu7x:2x2x1
jax: 0.10.0
libtpu: 0.0.40
codegen_flags: <defaults>
</compile_context>

<pallas_src>
import functools
import math

import jax
import jax.numpy as jnp
from jax import lax
from jax.experimental import pallas as pl
from jax.experimental.pallas import tpu as pltpu


def _ffn_kernel(x_ref, w1_ref, b1_ref, w2_ref, b2_ref, o_ref, acc_ref, *,
                approximate_gelu):
    """One (row-tile, ffn-tile) step of x @ W1 + b1 -> GELU -> @ W2 + b2."""
    k = pl.program_id(1)

    # Initialize the resident f32 accumulator with the broadcast output bias
    # on the first ffn step (fuses the b2 add into the pipeline).
    @pl.when(k == 0)
    def _init():
        acc_ref[...] = jnp.broadcast_to(
            b2_ref[...].astype(jnp.float32), acc_ref.shape)

    # Feed the MXU in the weight dtype (bf16 in the default path); accumulate
    # in f32 via preferred_element_type.
    x = x_ref[...].astype(w1_ref.dtype)                          # (tm, hidden)
    h = jnp.dot(x, w1_ref[...], preferred_element_type=jnp.float32)
    h = h + b1_ref[...].astype(jnp.float32)                      # (tm, tf)
    if approximate_gelu:
        # tanh approximation: single EUP op on an otherwise idle slot.
        h = jax.nn.gelu(h, approximate=True)
    else:
        # exact GELU (nn.GELU default): 0.5 * x * (1 + erf(x / sqrt(2)))
        h = 0.5 * h * (1.0 + lax.erf(h * jnp.float32(1.0 / math.sqrt(2.0))))
    # layer2 partial: accumulate h @ W2[k-tile, :] into the resident f32 acc.
    acc_ref[...] += jnp.dot(h.astype(w2_ref.dtype), w2_ref[...],
                            preferred_element_type=jnp.float32)

    @pl.when(k == pl.num_programs(1) - 1)
    def _finalize():
        o_ref[...] = acc_ref[...].astype(o_ref.dtype)


def _round_up(x, mult):
    return (x + mult - 1) // mult * mult


def _pick_ffn_tile(ffn, tf):
    """Pick the ffn (reduction) tile: full extent if it fits, else the largest
    128-multiple <= tf that divides ffn (avoids per-call weight padding);
    fall back to a plain 128-multiple (padding path) only if none divides."""
    if ffn <= tf:
        return ffn
    top = min(tf, ffn) // 128 * 128
    for t in range(top, 127, -128):
        if ffn % t == 0:
            return t
    return top if top > 0 else min(tf, ffn)


def _vmem_estimate(tm, tf, hidden, x_dt, w_dt, o_dt):
    """Rough double-buffered VMEM footprint for one grid step."""
    nb = lambda shape, dt: math.prod(shape) * jnp.dtype(dt).itemsize
    return (2 * nb((tm, hidden), x_dt)          # x rows (double-buffered)
            + 2 * nb((hidden, tf), w_dt)        # W1 tile
            + 2 * nb((1, tf), jnp.float32)      # b1 tile
            + 2 * nb((tf, hidden), w_dt)        # W2 tile
            + 2 * nb((1, hidden), jnp.float32)  # b2
            + 2 * nb((tm, hidden), o_dt)        # out (double-buffered)
            + nb((tm, hidden), jnp.float32)     # resident accumulator
            + 2 * nb((tm, tf), jnp.float32))    # GELU intermediate h


def feed_forward_network(x, w1, b1, w2, b2, *, tm=512, tf=512,
                         use_bf16_mxu=True, approximate_gelu=False,
                         vmem_limit_bytes=None):
    """Fused FFN applied to the last dim of x.

    x:  [..., hidden]
    w1: [hidden, ffn]   (PyTorch layer1.weight.T)      b1: [ffn]
    w2: [ffn, hidden]   (PyTorch layer2.weight.T)      b2: [hidden]

    tm: row tile (multiple of 8; large — 256..512 — for production).
    tf: ffn (reduction) tile target; snapped to a divisor of ffn when possible.
    use_bf16_mxu: feed the MXU bf16 operands (f32 accumulation kept).
    """
    orig_shape = x.shape
    hidden = orig_shape[-1]
    ffn = w1.shape[1]
    x2d = x.reshape(-1, hidden)
    m = x2d.shape[0]

    # bf16 MXU operands (weights); ideally done once at model init, not per call.
    if use_bf16_mxu and jnp.dtype(w1.dtype) == jnp.float32:
        w1 = w1.astype(jnp.bfloat16)
        w2 = w2.astype(jnp.bfloat16)
    b1 = b1.astype(jnp.float32)
    b2 = b2.astype(jnp.float32)

    # ----- ffn (reduction) tiling -----
    tf_eff = _pick_ffn_tile(ffn, tf)
    ffn_p = _round_up(ffn, tf_eff)
    if ffn_p != ffn:
        # Fallback only; zero-padding ffn is exact (GELU(0)=0, zero W2 rows).
        w1 = jnp.pad(w1, ((0, 0), (0, ffn_p - ffn)))
        b1 = jnp.pad(b1, (0, ffn_p - ffn))
        w2 = jnp.pad(w2, ((0, ffn_p - ffn), (0, 0)))

    # ----- row tiling -----
    tm_eff = min(tm, _round_up(m, 8))

    # Generation-aware VMEM budget (v7x has only 64 MiB/TC).
    try:
        vmem_cap = int(pltpu.get_tpu_info().vmem_capacity_bytes)
    except Exception:  # pragma: no cover - conservative fallback
        vmem_cap = 64 << 20
    vmem_budget = max(vmem_cap - (8 << 20), 16 << 20)
    while (tm_eff > 64 and
           _vmem_estimate(tm_eff, tf_eff, hidden, x2d.dtype, w1.dtype,
                          x.dtype) > vmem_budget):
        tm_eff = max(64, _round_up(tm_eff // 2, 8))

    # Megacore: make sure the "parallel" row axis has >= 2 tiles when possible
    # so both v7x TensorCores get work.
    if m > 8 and _round_up(m, tm_eff) // tm_eff < 2:
        tm_eff = _round_up(-(-m // 2), 8)

    m_p = _round_up(m, tm_eff)
    if m_p != m:
        x2d = jnp.pad(x2d, ((0, m_p - m), (0, 0)))

    b1_2d = b1.reshape(1, ffn_p)
    b2_2d = b2.reshape(1, hidden)

    n_rows = m_p // tm_eff
    n_k = ffn_p // tf_eff

    est = _vmem_estimate(tm_eff, tf_eff, hidden, x2d.dtype, w1.dtype, x.dtype)
    if vmem_limit_bytes is None:
        # Explicit scoped limit (v5e default is only 16 MiB) capped by physical.
        vmem_limit_bytes = int(min(max(2 * est, 32 << 20), vmem_budget))

    kernel = functools.partial(_ffn_kernel, approximate_gelu=approximate_gelu)

    out = pl.pallas_call(
        kernel,
        out_shape=jax.ShapeDtypeStruct((m_p, hidden), x.dtype),
        grid_spec=pltpu.PrefetchScalarGridSpec(
            num_scalar_prefetch=0,
            grid=(n_rows, n_k),                                    # reduction last
            in_specs=[
                pl.BlockSpec((tm_eff, hidden), lambda i, k: (i, 0)),   # x rows
                pl.BlockSpec((hidden, tf_eff), lambda i, k: (0, k)),   # W1 tile
                pl.BlockSpec((1, tf_eff), lambda i, k: (0, k)),        # b1 tile
                pl.BlockSpec((tf_eff, hidden), lambda i, k: (k, 0)),   # W2 tile
                pl.BlockSpec((1, hidden), lambda i, k: (0, 0)),        # b2
            ],
            out_specs=pl.BlockSpec((tm_eff, hidden), lambda i, k: (i, 0)),
            scratch_shapes=[pltpu.VMEM((tm_eff, hidden), jnp.float32)],
        ),
        compiler_params=pltpu.CompilerParams(
            dimension_semantics=("parallel", "arbitrary"),
            vmem_limit_bytes=vmem_limit_bytes),
    )(x2d, w1, b1_2d, w2, b2_2d)

    if m_p != m:
        out = out[:m]
    return out.reshape(orig_shape)


def _reference_ffn(x, w1, b1, w2, b2, *, mxu_dtype=None):
    """Pure-JAX reference; mxu_dtype mirrors the kernel's MXU operand cast."""
    cd = mxu_dtype if mxu_dtype is not None else x.dtype
    h = jnp.dot(x.astype(cd), w1.astype(cd),
                preferred_element_type=jnp.float32) + b1
    h = 0.5 * h * (1.0 + lax.erf(h / jnp.float32(math.sqrt(2.0))))
    return jnp.dot(h.astype(cd), w2.astype(cd),
                   preferred_element_type=jnp.float32) + b2


def _make_params(key, hidden, ffn):
    kw1, kb1, kw2, kb2 = jax.random.split(key, 4)
    bound1 = 1.0 / math.sqrt(hidden)
    w1 = jax.random.uniform(kw1, (hidden, ffn), minval=-bound1, maxval=bound1,
                            dtype=jnp.float32)
    b1 = jax.random.uniform(kb1, (ffn,), minval=-bound1, maxval=bound1,
                            dtype=jnp.float32)
    bound2 = 1.0 / math.sqrt(ffn)
    w2 = jax.random.uniform(kw2, (ffn, hidden), minval=-bound2, maxval=bound2,
                            dtype=jnp.float32)
    b2 = jax.random.uniform(kb2, (hidden,), minval=-bound2, maxval=bound2,
                            dtype=jnp.float32)
    return w1, b1, w2, b2


if __name__ == "__main__":
    key = jax.random.PRNGKey(0)
    k0, k1, k2, k3, k4, k5 = jax.random.split(key, 6)

    # Test 1: module-scale toy shapes (batch=2, seq=8, hidden=32, ffn=64);
    # exact f32 path (bit-level parity check with the reference).
    hidden, ffn = 32, 64
    x = jax.random.normal(k0, (2, 8, hidden), dtype=jnp.float32)
    w1, b1, w2, b2 = _make_params(k1, hidden, ffn)
    out = jax.block_until_ready(
        feed_forward_network(x, w1, b1, w2, b2, use_bf16_mxu=False))
    ref = _reference_ffn(x, w1, b1, w2, b2)
    assert out.shape == x.shape
    assert jnp.allclose(out, ref, atol=1e-4, rtol=1e-4), "mismatch (test 1)"

    # Test 2: lane-dense hidden, ragged row count -> row padding + multi-step
    # ffn reduction with the resident f32 accumulator; bf16 MXU path.
    hidden, ffn = 128, 256
    x = jax.random.normal(k2, (2, 5, hidden), dtype=jnp.float32)   # M = 10
    w1, b1, w2, b2 = _make_params(k3, hidden, ffn)
    out = jax.block_until_ready(
        feed_forward_network(x, w1, b1, w2, b2, tm=8, tf=128))
    ref = _reference_ffn(x, w1, b1, w2, b2, mxu_dtype=jnp.bfloat16)
    assert out.shape == x.shape
    assert jnp.allclose(out, ref, atol=2e-3, rtol=2e-3), "mismatch (test 2)"

    # Test 3: default tiles, ffn tile snapped to a divisor (640 -> tf_eff=128),
    # megacore row split (M=48 -> two row tiles), bf16 MXU path.
    hidden, ffn = 128, 640
    x = jax.random.normal(k4, (3, 16, hidden), dtype=jnp.float32)  # M = 48
    w1, b1, w2, b2 = _make_params(k5, hidden, ffn)
    out = jax.block_until_ready(feed_forward_network(x, w1, b1, w2, b2))
    ref = _reference_ffn(x, w1, b1, w2, b2, mxu_dtype=jnp.bfloat16)
    assert out.shape == x.shape
    assert jnp.allclose(out, ref, atol=2e-3, rtol=2e-3), "mismatch (test 3)"

    # NOTE: nn.Dropout is constructed but never used in the PyTorch forward,
    # so it is intentionally omitted here (inference semantics match exactly).
    print("KERNEL_OK")
</pallas_src>

<mosaic_0001>
module attributes {stable_mosaic.version = 11 : i64} {
  func.func @_ffn_kernel(%arg0: i32, %arg1: i32, %arg2: memref<8x32xf32, #tpu.memory_space<vmem>>, %arg3: memref<32x64xf32, #tpu.memory_space<vmem>>, %arg4: memref<1x64xf32, #tpu.memory_space<vmem>>, %arg5: memref<64x32xf32, #tpu.memory_space<vmem>>, %arg6: memref<1x32xf32, #tpu.memory_space<vmem>>, %arg7: memref<8x32xf32, #tpu.memory_space<vmem>>, %arg8: memref<8x32xf32, #tpu.memory_space<vmem>>) attributes {dimension_semantics = [#tpu.dimension_semantics<parallel>, #tpu.dimension_semantics<arbitrary>], iteration_bounds = array<i64: 2, 1>, scalar_prefetch = 0 : i64, scratch_operands = 1 : i64, tpu.core_type = #tpu.core_type<tc>, window_params = [{transform_indices = @transform_0, window_bounds = array<i64: 8, 32>}, {transform_indices = @transform_1, window_bounds = array<i64: 32, 64>}, {transform_indices = @transform_2, window_bounds = array<i64: 1, 64>}, {transform_indices = @transform_3, window_bounds = array<i64: 64, 32>}, {pipeline_mode = #tpu.pipeline_mode<synchronous>, transform_indices = @transform_4, window_bounds = array<i64: 1, 32>}, {transform_indices = @transform_5, window_bounds = array<i64: 8, 32>}]} {
    %c0_i32 = arith.constant 0 : i32
    %0 = arith.cmpi eq, %arg1, %c0_i32 : i32
    %1 = arith.extui %0 : i1 to i32
    %c0_i32_0 = arith.constant 0 : i32
    %2 = arith.cmpi ne, %1, %c0_i32_0 : i32
    scf.if %2 {
      %c0_18 = arith.constant 0 : index
      %c0_19 = arith.constant 0 : index
      %25 = vector.load %arg6[%c0_18, %c0_19] : memref<1x32xf32, #tpu.memory_space<vmem>>, vector<1x32xf32>
      %26 = vector.shape_cast %25 : vector<1x32xf32> to vector<1x32xf32>
      %27 = vector.broadcast %26 : vector<1x32xf32> to vector<8x32xf32>
      %c0_20 = arith.constant 0 : index
      %c0_21 = arith.constant 0 : index
      %28 = vector.load %arg8[%c0_20, %c0_21] : memref<8x32xf32, #tpu.memory_space<vmem>>, vector<8x32xf32>
      tpu.vector_store %arg8[%c0_20, %c0_21], %27 {strides = array<i32>} : memref<8x32xf32, #tpu.memory_space<vmem>>, vector<8x32xf32>,
    } else {
    }
    %c0 = arith.constant 0 : index
    %c0_1 = arith.constant 0 : index
    %3 = vector.load %arg2[%c0, %c0_1] : memref<8x32xf32, #tpu.memory_space<vmem>>, vector<8x32xf32>
    %c0_2 = arith.constant 0 : index
    %c0_3 = arith.constant 0 : index
    %4 = vector.load %arg3[%c0_2, %c0_3] : memref<32x64xf32, #tpu.memory_space<vmem>>, vector<32x64xf32>
    %cst = arith.constant dense<0.000000e+00> : vector<8x64xf32>
    %5 = tpu.matmul %3, %4, %cst {dimension_numbers = #tpu.dot_dimension_numbers<[1], [0], [0], [1], [0, 0, 1, 1], [], []>} : vector<8x32xf32>, vector<32x64xf32>, vector<8x64xf32> -> vector<8x64xf32>
    %c0_4 = arith.constant 0 : index
    %c0_5 = arith.constant 0 : index
    %6 = vector.load %arg4[%c0_4, %c0_5] : memref<1x64xf32, #tpu.memory_space<vmem>>, vector<1x64xf32>
    %7 = vector.broadcast %6 : vector<1x64xf32> to vector<8x64xf32>
    %8 = arith.addf %5, %7 : vector<8x64xf32>
    %cst_6 = arith.constant 5.000000e-01 : f32
    %9 = vector.broadcast %cst_6 : f32 to vector<8x64xf32>
    %10 = arith.mulf %9, %8 : vector<8x64xf32>
    %cst_7 = arith.constant 0.707106769 : f32
    %11 = vector.broadcast %cst_7 : f32 to vector<8x64xf32>
    %12 = arith.mulf %8, %11 : vector<8x64xf32>
    %13 = math.erf %12 : vector<8x64xf32>
    %cst_8 = arith.constant 1.000000e+00 : f32
    %14 = vector.broadcast %cst_8 : f32 to vector<8x64xf32>
    %15 = arith.addf %14, %13 : vector<8x64xf32>
    %16 = arith.mulf %10, %15 : vector<8x64xf32>
    %c0_9 = arith.constant 0 : index
    %c0_10 = arith.constant 0 : index
    %17 = vector.load %arg8[%c0_9, %c0_10] : memref<8x32xf32, #tpu.memory_space<vmem>>, vector<8x32xf32>
    %c0_11 = arith.constant 0 : index
    %c0_12 = arith.constant 0 : index
    %18 = vector.load %arg5[%c0_11, %c0_12] : memref<64x32xf32, #tpu.memory_space<vmem>>, vector<64x32xf32>
    %cst_13 = arith.constant dense<0.000000e+00> : vector<8x32xf32>
    %19 = tpu.matmul %16, %18, %cst_13 {dimension_numbers = #tpu.dot_dimension_numbers<[1], [0], [0], [1], [0, 0, 1, 1], [], []>} : vector<8x64xf32>, vector<64x32xf32>, vector<8x32xf32> -> vector<8x32xf32>
    %20 = arith.addf %17, %19 : vector<8x32xf32>
    %c0_14 = arith.constant 0 : index
    %c0_15 = arith.constant 0 : index
    %21 = vector.load %arg8[%c0_14, %c0_15] : memref<8x32xf32, #tpu.memory_space<vmem>>, vector<8x32xf32>
    tpu.vector_store %arg8[%c0_14, %c0_15], %20 {strides = array<i32>} : memref<8x32xf32, #tpu.memory_space<vmem>>, vector<8x32xf32>,
    %c0_i32_16 = arith.constant 0 : i32
    %22 = arith.cmpi eq, %arg1, %c0_i32_16 : i32
    %23 = arith.extui %22 : i1 to i32
    %c0_i32_17 = arith.constant 0 : i32
    %24 = arith.cmpi ne, %23, %c0_i32_17 : i32
    scf.if %24 {
      %c0_18 = arith.constant 0 : index
      %c0_19 = arith.constant 0 : index
      %25 = vector.load %arg8[%c0_18, %c0_19] : memref<8x32xf32, #tpu.memory_space<vmem>>, vector<8x32xf32>
      %c0_20 = arith.constant 0 : index
      %c0_21 = arith.constant 0 : index
      %26 = vector.load %arg7[%c0_20, %c0_21] : memref<8x32xf32, #tpu.memory_space<vmem>>, vector<8x32xf32>
      tpu.vector_store %arg7[%c0_20, %c0_21], %25 {strides = array<i32>} : memref<8x32xf32, #tpu.memory_space<vmem>>, vector<8x32xf32>,
    } else {
    }
    return
  }
  func.func @transform_0(%arg0: i32, %arg1: i32) -> (i32, i32) {
    %c0_i32 = arith.constant 0 : i32
    %c0_i32_0 = arith.constant 0 : i32
    return %arg0, %c0_i32 : i32, i32
  }
  func.func @transform_1(%arg0: i32, %arg1: i32) -> (i32, i32) {
    %c0_i32 = arith.constant 0 : i32
    %c0_i32_0 = arith.constant 0 : i32
    return %c0_i32, %arg1 : i32, i32
  }
  func.func @transform_2(%arg0: i32, %arg1: i32) -> (i32, i32) {
    %c0_i32 = arith.constant 0 : i32
    %c0_i32_0 = arith.constant 0 : i32
    return %c0_i32, %arg1 : i32, i32
  }
  func.func @transform_3(%arg0: i32, %arg1: i32) -> (i32, i32) {
    %c0_i32 = arith.constant 0 : i32
    %c0_i32_0 = arith.constant 0 : i32
    return %arg1, %c0_i32 : i32, i32
  }
  func.func @transform_4(%arg0: i32, %arg1: i32) -> (i32, i32) {
    %c0_i32 = arith.constant 0 : i32
    %c0_i32_0 = arith.constant 0 : i32
    %c0_i32_1 = arith.constant 0 : i32
    return %c0_i32, %c0_i32_0 : i32, i32
  }
  func.func @transform_5(%arg0: i32, %arg1: i32) -> (i32, i32) {
    %c0_i32 = arith.constant 0 : i32
    %c0_i32_0 = arith.constant 0 : i32
    return %arg0, %c0_i32 : i32, i32
  }
}

</mosaic_0001>

<llo_original>
// kernel: tpu_custom_call.1
$region0: #{tpu_custom_call.1}
  #allocation0 [shape = 'u32[]', space=smem, size = 0x4, offset = 0x4, fixed_abs, tag = 'smem constant byte address 0x4 - core index']
  #allocation1 [shape = 'u32[144,128]{1,0:T(1,128)}', space=vmem, size = 0x12000, scoped, tag = 'internal scratch']
  #allocation2 [shape = 'f32[8,32]{1,0:T(8,128)}', space=vmem, size = 0x1000, scoped, tag = 'scratch operand']
  %s0 = inlined_call_operand.vmem [shape: f32[16,32], index: 0, kind: input, shape index: {}]
  %s1 = inlined_call_operand.vmem [shape: f32[32,64], index: 1, kind: input, shape index: {}]
  %s2 = inlined_call_operand.vmem [shape: f32[1,64], index: 2, kind: input, shape index: {}]
  %s3 = inlined_call_operand.vmem [shape: f32[64,32], index: 3, kind: input, shape index: {}]
  %s4 = inlined_call_operand.vmem [shape: f32[1,32], index: 4, kind: input, shape index: {}]
  %s5 = inlined_call_operand.hbm [shape: f32[16,32], index: 5, kind: output, shape index: {}]
  %s6 = sld [smem:[#allocation0]]
  $region61: #{tpu_custom_call.1} parent=0
    _
  %s8 = ssub.s32 1, %s6
  %s9 = scalar_select 0, %s8, %s6
  $region1: #{tpu_custom_call.1} parent=0
    #allocation3 [shape = 'u8[8192]{0}', space=vmem, size = 0x2000, scoped, tag = 'output window, operand 0']
    #allocation4 [shape = 's32[2]{0}', space=sflag, size = 0x8, scoped, tag = 'scoped memory for tpu_custom_call.1']
    %10 = vsyncpa [#allocation4], 0
    %s11 = scalar_lea.sflag [#allocation4], 1
    %12 = vsyncpa %s11, 0
    loop: start=0, step=1, limit=4
    $region2: #{tpu_custom_call.1} parent=1 // loop_pre_header
      _
    $region3: #{tpu_custom_call.1} parent=1 // loop_header
      %s14 = sphi 0, %s18
      %p15 = scmp.ge.s32.totalorder %s14, 4
      %s21 = sphi 0, %s33
      %s22 = sphi 0, %s29
      %s23 = sphi 0, %s21
      %s24 = sphi 0, %s22
      %s25 = sphi 0, %s23
      %s26 = sphi 0, %s24
      %s36 = sphi 0, %s38
      %s39 = sphi 0, %s36
      %s40 = sphi 0, %s39
      %s56 = sphi 0, %s40
      %s62 = sphi 0, %s64
      %s65 = sphi 0, %s62
      %s66 = sphi 0, %s65
      %s82 = sphi 0, %s66
      %s88 = sphi 0, %s90
      %s91 = sphi 0, %s88
      %s92 = sphi 0, %s91
      %s108 = sphi 0, %s92
      %s114 = sphi 0, %s116
      %s117 = sphi 0, %s114
      %s118 = sphi 0, %s117
      %s134 = sphi 0, %s118
      %s138 = sphi 0, %s138
      %s140 = sphi 0, %s138
      %s141 = sphi 0, %s140
      %s155 = sphi 0, %s141
      %s161 = sphi 0, %s163
      %s164 = sphi 0, %s161
      %s165 = sphi 0, %s164
      %s181 = sphi 0, %s165
    $region4: #{tpu_custom_call.1} parent=1 // loop_header_branch
      %17 = sbr.rel (%p15) target = $region8
    $region5: #{tpu_custom_call.1} parent=1 // loop_body
      %s19 = ssub.s32 %s14, 1
      %s20 = ssub.s32 %s14, 2
      %s27 = sadd.s32 1, %s22
      %p28 = scmp.ge.s32.totalorder %s27, 1
      %s29 = scalar_select %p28, 0, %s27
      %s30 = sadd.s32 1, %s21
      %s31 = scalar_select %p28, %s30, %s21
      %p32 = scmp.ge.s32.totalorder %s31, 2
      %s33 = scalar_select %p32, 0, %s31
      %s34 = ssub.s32 %s21, %s33
      %p35 = scmp.eq.s32.totalorder %s34, 0
      %s37 = sadd.s32 %s36, 1
      %s38 = scalar_select %p35, %s36, %s37
      %p41 = pneg %p35
      %p42 = scmp.eq.s32.totalorder %s14, 1
      %p43 = por %p41, %p42
      %p44 = scmp.ne.s32.totalorder %s36, %s39
      %p45 = scmp.eq.s32.totalorder %s14, 0
      %p46 = por %p44, %p45
      %p47 = scmp.ne.s32.totalorder %s36, %s39
      %p48 = scmp.eq.s32.totalorder %s19, 1
      %p49 = por %p47, %p48
      %p50 = scmp.ne.s32.totalorder %s39, %s40
      %p51 = scmp.eq.s32.totalorder %s19, 0
      %p52 = por %p50, %p51
      %p53 = scmp.ne.s32.totalorder %s39, %s40
      %p54 = scmp.eq.s32.totalorder %s20, 1
      %p55 = por %p53, %p54
      %p57 = scmp.ne.s32.totalorder %s40, %s56
      %p58 = scmp.eq.s32.totalorder %s20, 0
      %p59 = por %p57, %p58
      %s60 = ssub.s32 %s22, %s29
      %p61 = scmp.eq.s32.totalorder %s60, 0
      %s63 = sadd.s32 %s62, 1
      %s64 = scalar_select %p61, %s62, %s63
      %p67 = pneg %p61
      %p68 = scmp.eq.s32.totalorder %s14, 1
      %p69 = por %p67, %p68
      %p70 = scmp.ne.s32.totalorder %s62, %s65
      %p71 = scmp.eq.s32.totalorder %s14, 0
      %p72 = por %p70, %p71
      %p73 = scmp.ne.s32.totalorder %s62, %s65
      %p74 = scmp.eq.s32.totalorder %s19, 1
      %p75 = por %p73, %p74
      %p76 = scmp.ne.s32.totalorder %s65, %s66
      %p77 = scmp.eq.s32.totalorder %s19, 0
      %p78 = por %p76, %p77
      %p79 = scmp.ne.s32.totalorder %s65, %s66
      %p80 = scmp.eq.s32.totalorder %s20, 1
      %p81 = por %p79, %p80
      %p83 = scmp.ne.s32.totalorder %s66, %s82
      %p84 = scmp.eq.s32.totalorder %s20, 0
      %p85 = por %p83, %p84
      %s86 = ssub.s32 %s22, %s29
      %p87 = scmp.eq.s32.totalorder %s86, 0
      %s89 = sadd.s32 %s88, 1
      %s90 = scalar_select %p87, %s88, %s89
      %p93 = pneg %p87
      %p94 = scmp.eq.s32.totalorder %s14, 1
      %p95 = por %p93, %p94
      %p96 = scmp.ne.s32.totalorder %s88, %s91
      %p97 = scmp.eq.s32.totalorder %s14, 0
      %p98 = por %p96, %p97
      %p99 = scmp.ne.s32.totalorder %s88, %s91
      %p100 = scmp.eq.s32.totalorder %s19, 1
      %p101 = por %p99, %p100
      %p102 = scmp.ne.s32.totalorder %s91, %s92
      %p103 = scmp.eq.s32.totalorder %s19, 0
      %p104 = por %p102, %p103
      %p105 = scmp.ne.s32.totalorder %s91, %s92
      %p106 = scmp.eq.s32.totalorder %s20, 1
      %p107 = por %p105, %p106
      %p109 = scmp.ne.s32.totalorder %s92, %s108
      %p110 = scmp.eq.s32.totalorder %s20, 0
      %p111 = por %p109, %p110
      %s112 = ssub.s32 %s22, %s29
      %p113 = scmp.eq.s32.totalorder %s112, 0
      %s115 = sadd.s32 %s114, 1
      %s116 = scalar_select %p113, %s114, %s115
      %p119 = pneg %p113
      %p120 = scmp.eq.s32.totalorder %s14, 1
      %p121 = por %p119, %p120
      %p122 = scmp.ne.s32.totalorder %s114, %s117
      %p123 = scmp.eq.s32.totalorder %s14, 0
      %p124 = por %p122, %p123
      %p125 = scmp.ne.s32.totalorder %s114, %s117
      %p126 = scmp.eq.s32.totalorder %s19, 1
      %p127 = por %p125, %p126
      %p128 = scmp.ne.s32.totalorder %s117, %s118
      %p129 = scmp.eq.s32.totalorder %s19, 0
      %p130 = por %p128, %p129
      %p131 = scmp.ne.s32.totalorder %s117, %s118
      %p132 = scmp.eq.s32.totalorder %s20, 1
      %p133 = por %p131, %p132
      %p135 = scmp.ne.s32.totalorder %s118, %s134
      %p136 = scmp.eq.s32.totalorder %s20, 0
      %p137 = por %p135, %p136
      %s139 = sadd.s32 %s138, 1
      %p142 = scmp.eq.s32.totalorder %s14, 1
      %p143 = scmp.ne.s32.totalorder %s138, %s140
      %p144 = scmp.eq.s32.totalorder %s14, 0
      %p145 = por %p143, %p144
      %p146 = scmp.ne.s32.totalorder %s138, %s140
      %p147 = scmp.eq.s32.totalorder %s19, 1
      %p148 = por %p146, %p147
      %p149 = scmp.ne.s32.totalorder %s140, %s141
      %p150 = scmp.eq.s32.totalorder %s19, 0
      %p151 = por %p149, %p150
      %p152 = scmp.ne.s32.totalorder %s140, %s141
      %p153 = scmp.eq.s32.totalorder %s20, 1
      %p154 = por %p152, %p153
      %p156 = scmp.ne.s32.totalorder %s141, %s155
      %p157 = scmp.eq.s32.totalorder %s20, 0
      %p158 = por %p156, %p157
      %s159 = ssub.s32 %s21, %s33
      %p160 = scmp.eq.s32.totalorder %s159, 0
      %s162 = sadd.s32 %s161, 1
      %s163 = scalar_select %p160, %s161, %s162
      %p166 = pneg %p160
      %p167 = scmp.eq.s32.totalorder %s14, 1
      %p168 = por %p166, %p167
      %p169 = scmp.ne.s32.totalorder %s161, %s164
      %p170 = scmp.eq.s32.totalorder %s14, 0
      %p171 = por %p169, %p170
      %p172 = scmp.ne.s32.totalorder %s161, %s164
      %p173 = scmp.eq.s32.totalorder %s19, 1
      %p174 = por %p172, %p173
      %p175 = scmp.ne.s32.totalorder %s164, %s165
      %p176 = scmp.eq.s32.totalorder %s19, 0
      %p177 = por %p175, %p176
      %p178 = scmp.ne.s32.totalorder %s164, %s165
      %p179 = scmp.eq.s32.totalorder %s20, 1
      %p180 = por %p178, %p179
      %p182 = scmp.ne.s32.totalorder %s165, %s181
      %p183 = scmp.eq.s32.totalorder %s20, 0
      %p184 = por %p182, %p183
      %p185 = scmp.le.s32.totalorder 1, %s14
      %p186 = scmp.lt.s32.totalorder %s14, 3
      %p187 = pnand %p185, %p186
      %p188 = pneg %p187
      // Predicated region
      $region9: #{tpu_custom_call.1} parent=5 // pred_check
        _
      $region10: #{tpu_custom_call.1} parent=5 // pred_check_branch
        %190 = sbr.rel (%p187) target = $region12
      $region11: #{tpu_custom_call.1} parent=5 // pred_region
        %s191 = ssub.s32 %s14, 1
        // Predicated region
        $region13: #{tpu_custom_call.1} parent=11 // pred_check
          %p192 = pneg %p78
        $region14: #{tpu_custom_call.1} parent=11 // pred_check_branch
          %194 = sbr.rel (%p192) target = $region16
        $region15: #{tpu_custom_call.1} parent=11 // pred_region
          %p195 = scmp.lt.s32.totalorder %s24, 0
          %s196 = scalar_select %p195, %s24, 0
          %s197 = smul.addr %s196, 8
          %s198 = scalar_lea.vmem %s1, %s197
        $region16: #{tpu_custom_call.1} parent=11 // pred_fallthru
          _
        // Predicated region
        $region17: #{tpu_custom_call.1} parent=11 // pred_check
          %p199 = pneg %p104
        $region18: #{tpu_custom_call.1} parent=11 // pred_check_branch
          %201 = sbr.rel (%p199) target = $region20
        $region19: #{tpu_custom_call.1} parent=11 // pred_region
          %p202 = scmp.lt.s32.totalorder %s24, 0
          %s203 = scalar_select %p202, %s24, 0
          %s204 = scalar_lea.vmem %s2, %s203
        $region20: #{tpu_custom_call.1} parent=11 // pred_fallthru
          _
        // Predicated region
        $region21: #{tpu_custom_call.1} parent=11 // pred_check
          %p205 = pneg %p130
        $region22: #{tpu_custom_call.1} parent=11 // pred_check_branch
          %207 = sbr.rel (%p205) target = $region24
        $region23: #{tpu_custom_call.1} parent=11 // pred_region
          %s208 = smul.u32 8, %s24
          %p209 = scmp.lt.s32.totalorder %s208, 7
          %s210 = scalar_select %p209, %s208, 7
          %s211 = smul.addr %s210, 8
          %s212 = scalar_lea.vmem %s3, %s211
          %s213 = smul.u32 8, %s24
        $region24: #{tpu_custom_call.1} parent=11 // pred_fallthru
          _
        // Predicated region
        $region25: #{tpu_custom_call.1} parent=11 // pred_check
          %p214 = pneg %p151
        $region26: #{tpu_custom_call.1} parent=11 // pred_check_branch
          %216 = sbr.rel (%p214) target = $region28
        $region27: #{tpu_custom_call.1} parent=11 // pred_region
          _
        $region28: #{tpu_custom_call.1} parent=11 // pred_fallthru
          _
      $region12: #{tpu_custom_call.1} parent=5 // pred_fallthru
        _
      %p217 = scmp.lt.s32.totalorder %s14, 2
      // Predicated region
      $region29: #{tpu_custom_call.1} parent=5 // pred_check
        %p218 = pneg %p217
      $region30: #{tpu_custom_call.1} parent=5 // pred_check_branch
        %220 = sbr.rel (%p218) target = $region32
      $region31: #{tpu_custom_call.1} parent=5 // pred_region
        // Predicated region
        $region33: #{tpu_custom_call.1} parent=31 // pred_check
          %p221 = pneg %p46
        $region34: #{tpu_custom_call.1} parent=31 // pred_check_branch
          %223 = sbr.rel (%p221) target = $region36
        $region35: #{tpu_custom_call.1} parent=31 // pred_region
          %p224 = scmp.lt.s32.totalorder %s21, 1
          %s225 = scalar_select %p224, %s21, 1
          %s226 = smul.addr %s225, 8
          %s227 = scalar_lea.vmem %s0, %s226
        $region36: #{tpu_custom_call.1} parent=31 // pred_fallthru
          _
      $region32: #{tpu_custom_call.1} parent=5 // pred_fallthru
        _
      %p228 = scmp.le.s32.totalorder 1, %s14
      %p229 = scmp.lt.s32.totalorder %s14, 3
      %p230 = pnand %p228, %p229
      %p231 = pneg %p230
      // Predicated region
      $region37: #{tpu_custom_call.1} parent=5 // pred_check
        _
      $region38: #{tpu_custom_call.1} parent=5 // pred_check_branch
        %233 = sbr.rel (%p230) target = $region40
      $region39: #{tpu_custom_call.1} parent=5 // pred_region
        %s234 = ssub.s32 %s14, 1
        %p235 = scmp.lt.s32.totalorder %s23, 1
        %s236 = scalar_select %p235, %s23, 1
        %s237 = smul.addr %s236, 8
        %s238 = scalar_lea.vmem %s0, %s237
        %p239 = pneg %p52
        %p240 = pneg %p49
        %p241 = scmp.lt.s32.totalorder %s24, 0
        %s242 = scalar_select %p241, %s24, 0
        %s243 = smul.addr %s242, 8
        %s244 = scalar_lea.vmem %s1, %s243
        %p245 = pneg %p78
        %p246 = pneg %p75
        %p247 = scmp.lt.s32.totalorder %s24, 0
        %s248 = scalar_select %p247, %s24, 0
        %s249 = scalar_lea.vmem %s2, %s248
        %p250 = pneg %p104
        %p251 = pneg %p101
        %s252 = smul.u32 8, %s24
        %p253 = scmp.lt.s32.totalorder %s252, 7
        %s254 = scalar_select %p253, %s252, 7
        %s255 = smul.addr %s254, 8
        %s256 = scalar_lea.vmem %s3, %s255
        %p257 = pneg %p130
        %p258 = pneg %p127
        %p259 = pneg %p151
        %p260 = pneg %p148
        %p261 = pneg %p177
        %p262 = pneg %p174
        %s263 = sand.u32 %s164, 1
        %s264 = scalar_lea.sflag [#allocation4], %s263
        %s265 = sand.u32 %s164, 1
        %s266 = smul.addr %s265, 8
        %s267 = scalar_lea.vmem [#allocation3], %s266
        %p268 = scmp.lt.s32.totalorder %s23, 1
        %s269 = scalar_select %p268, %s23, 1
        %s270 = smul.addr %s269, 8
        %s271 = scalar_lea.vmem %s0, %s270
        %p272 = scmp.lt.s32.totalorder %s24, 0
        %s273 = scalar_select %p272, %s24, 0
        %s274 = smul.addr %s273, 8
        %s275 = scalar_lea.vmem %s1, %s274
        %p276 = scmp.lt.s32.totalorder %s24, 0
        %s277 = scalar_select %p276, %s24, 0
        %s278 = scalar_lea.vmem %s2, %s277
        %s279 = smul.u32 8, %s24
        %p280 = scmp.lt.s32.totalorder %s279, 7
        %s281 = scalar_select %p280, %s279, 7
        %s282 = smul.addr %s281, 8
        %s283 = scalar_lea.vmem %s3, %s282
        %s284 = smul.u32 8, %s24
        %p285 = scmp.eq.s32.totalorder %s24, 0
        // Predicated region
        $region41: #{tpu_custom_call.1} parent=39 // pred_check
          %p286 = pneg %p285
        $region42: #{tpu_custom_call.1} parent=39 // pred_check_branch
          %288 = sbr.rel (%p286) target = $region44
        $region43: #{tpu_custom_call.1} parent=39 // pred_region
          %v289 = vld [vmem:[%s4] sm:$0x1]
          %v291 = vlaneseq
          %v292 = vshrl.u32 %v291, 7
          %v293 = vsub.s32 0, %v292
          %v294 = vrot.slane %v289, %v293
          %vm296 = vcmask 261120
          %297 = vst.msk [vmem:[#allocation2] sm:$0xff] %vm296, %v294
        $region44: #{tpu_custom_call.1} parent=39 // pred_fallthru
          _
        %v298 = vld [vmem:[%s271] sm:$0xff]
        %v299 = vld [vmem:[%s275] sm:$0xff]
        %v300 = vld [vmem:[%s275 + $0x8] sm:$0xff]
        %v301 = vld [vmem:[%s275 + $0x10] sm:$0xff]
        %v302 = vld [vmem:[%s275 + $0x18] sm:$0xff]
        %v303 = vld [vmem:[%s278] sm:$0x1]
        %v305 = vlaneseq
        %v306 = vshrl.u32 %v305, 7
        %v307 = vsub.s32 0, %v306
        %v308 = vrot.slane %v303, %v307
        %vm310 = vcmask 261120
        %v312 = vsel %vm310, %v298, 0
        %314 = vmatprep.subr.mxu0 0.0
        %315 = vmatpush1.msra.mxu0 %v299
        %316 = vmatprep.subr.mxu0 0.0
        %317 = vmatpush1.msra.mxu0 %v300
        %318 = vmatprep.subr.mxu0 0.0
        %319 = vmatpush1.msra.mxu0 %v301
        %320 = vmatprep.subr.mxu0 0.0
        %321 = vmatpush1.msra.mxu0 %v302
        %322 = vmatprep.subr.mxu0 0.0
        %323 = vmatpush1.msra.mxu0 0.0
        %324 = vmatprep.subr.mxu0 0.0
        %325 = vmatpush1.msra.mxu0 0.0
        %326 = vmatprep.subr.mxu0 0.0
        %327 = vmatpush1.msra.mxu0 0.0
        %328 = vmatprep.subr.mxu0 0.0
        %329 = vmatpush1.msra.mxu0 0.0
        %330 = vmatprep.subr.mxu0 0.0
        %331 = vmatpush1.msra.mxu0 0.0
        %332 = vmatprep.subr.mxu0 0.0
        %333 = vmatpush1.msra.mxu0 0.0
        %334 = vmatprep.subr.mxu0 0.0
        %335 = vmatpush1.msra.mxu0 0.0
        %336 = vmatprep.subr.mxu0 0.0
        %337 = vmatpush1.msra.mxu0 0.0
        %338 = vmatprep.subr.mxu0 0.0
        %339 = vmatpush1.msra.mxu0 0.0
        %340 = vmatprep.subr.mxu0 0.0
        %341 = vmatpush1.msra.mxu0 0.0
        %342 = vmatprep.subr.mxu0 0.0
        %343 = vmatpush1.msra.mxu0 0.0
        %344 = vmatprep.subr.mxu0 0.0
        %345 = vmatpush1.msra.mxu0 0.0
        %346 = vmatprep.subr.mxu0 0.0
        %347 = vmatpush1.msra.mxu0 0.0
        %348 = vmatprep.subr.mxu0 0.0
        %349 = vmatpush1.msra.mxu0 0.0
        %350 = vmatprep.subr.mxu0 0.0
        %351 = vmatpush1.msra.mxu0 0.0
        %352 = vmatprep.subr.mxu0 0.0
        %353 = vmatpush1.msra.mxu0 0.0
        %354 = vmatprep.subr.mxu0 0.0
        %355 = vmatpush1.msra.mxu0 0.0
        %356 = vmatprep.subr.mxu0 0.0
        %357 = vmatpush1.msra.mxu0 0.0
        %358 = vmatprep.subr.mxu0 0.0
        %359 = vmatpush1.msra.mxu0 0.0
        %360 = vmatprep.subr.mxu0 0.0
        %361 = vmatpush1.msra.mxu0 0.0
        %362 = vmatprep.subr.mxu0 0.0
        %363 = vmatpush1.msra.mxu0 0.0
        %364 = vmatprep.subr.mxu0 0.0
        %365 = vmatpush1.msra.mxu0 0.0
        %366 = vmatprep.subr.mxu0 0.0
        %367 = vmatpush1.msra.mxu0 0.0
        %368 = vmatprep.subr.mxu0 0.0
        %369 = vmatpush1.msra.mxu0 0.0
        %370 = vmatprep.subr.mxu0 0.0
        %371 = vmatpush1.msra.mxu0 0.0
        %372 = vmatprep.subr.mxu0 0.0
        %373 = vmatpush1.msra.mxu0 0.0
        %374 = vmatprep.subr.mxu0 0.0
        %375 = vmatpush1.msra.mxu0 0.0
        %376 = vmatprep.subr.mxu0 0.0
        %377 = vmatpush1.msra.mxu0 0.0
        %378 = vmatprep.mubr.f32.mxu0 0.0
        %379 = vmatmul.mubr.f32.gmra.mrb[0].mxu0 %v312
        %v380 = vpop.f32.mrb[0].mxu0
        %v381 = vadd.f32 %v308, %v380
        %v382 = vpop.f32.mrb[0].mxu0
        %383 = vdwg.mxu0
        %v384 = vmul.f32 %v381, 0.5
        %v385 = vmul.f32 %v381, 0.70710677
        %v386 = verf.f32.pop %v385
        %v387 = vadd.f32 %v386, 1.0
        %v388 = vmul.f32 %v384, %v387
        %v389 = vld [vmem:[#allocation2] sm:$0xff]
        %v390 = vld [vmem:[%s283] sm:$0xff]
        %v391 = vld [vmem:[%s283 + $0x8] sm:$0xff]
        %v392 = vld [vmem:[%s283 + $0x10] sm:$0xff]
        %v393 = vld [vmem:[%s283 + $0x18] sm:$0xff]
        %v394 = vld [vmem:[%s283 + $0x20] sm:$0xff]
        %v395 = vld [vmem:[%s283 + $0x28] sm:$0xff]
        %v396 = vld [vmem:[%s283 + $0x30] sm:$0xff]
        %v397 = vld [vmem:[%s283 + $0x38] sm:$0xff]
        %vm398 = vcmask 523264
        %v400 = vsel %vm398, %v388, 0
        %402 = vmatprep.subr.mxu0 0.0
        %403 = vmatpush1.msra.mxu0 %v390
        %404 = vmatprep.subr.mxu0 0.0
        %405 = vmatpush1.msra.mxu0 %v391
        %406 = vmatprep.subr.mxu0 0.0
        %407 = vmatpush1.msra.mxu0 %v392
        %408 = vmatprep.subr.mxu0 0.0
        %409 = vmatpush1.msra.mxu0 %v393
        %410 = vmatprep.subr.mxu0 0.0
        %411 = vmatpush1.msra.mxu0 %v394
        %412 = vmatprep.subr.mxu0 0.0
        %413 = vmatpush1.msra.mxu0 %v395
        %414 = vmatprep.subr.mxu0 0.0
        %415 = vmatpush1.msra.mxu0 %v396
        %416 = vmatprep.subr.mxu0 0.0
        %417 = vmatpush1.msra.mxu0 %v397
        %418 = vmatprep.subr.mxu0 0.0
        %419 = vmatpush1.msra.mxu0 0.0
        %420 = vmatprep.subr.mxu0 0.0
        %421 = vmatpush1.msra.mxu0 0.0
        %422 = vmatprep.subr.mxu0 0.0
        %423 = vmatpush1.msra.mxu0 0.0
        %424 = vmatprep.subr.mxu0 0.0
        %425 = vmatpush1.msra.mxu0 0.0
        %426 = vmatprep.subr.mxu0 0.0
        %427 = vmatpush1.msra.mxu0 0.0
        %428 = vmatprep.subr.mxu0 0.0
        %429 = vmatpush1.msra.mxu0 0.0
        %430 = vmatprep.subr.mxu0 0.0
        %431 = vmatpush1.msra.mxu0 0.0
        %432 = vmatprep.subr.mxu0 0.0
        %433 = vmatpush1.msra.mxu0 0.0
        %434 = vmatprep.subr.mxu0 0.0
        %435 = vmatpush1.msra.mxu0 0.0
        %436 = vmatprep.subr.mxu0 0.0
        %437 = vmatpush1.msra.mxu0 0.0
        %438 = vmatprep.subr.mxu0 0.0
        %439 = vmatpush1.msra.mxu0 0.0
        %440 = vmatprep.subr.mxu0 0.0
        %441 = vmatpush1.msra.mxu0 0.0
        %442 = vmatprep.subr.mxu0 0.0
        %443 = vmatpush1.msra.mxu0 0.0
        %444 = vmatprep.subr.mxu0 0.0
        %445 = vmatpush1.msra.mxu0 0.0
        %446 = vmatprep.subr.mxu0 0.0
        %447 = vmatpush1.msra.mxu0 0.0
        %448 = vmatprep.subr.mxu0 0.0
        %449 = vmatpush1.msra.mxu0 0.0
        %450 = vmatprep.subr.mxu0 0.0
        %451 = vmatpush1.msra.mxu0 0.0
        %452 = vmatprep.subr.mxu0 0.0
        %453 = vmatpush1.msra.mxu0 0.0
        %454 = vmatprep.subr.mxu0 0.0
        %455 = vmatpush1.msra.mxu0 0.0
        %456 = vmatprep.subr.mxu0 0.0
        %457 = vmatpush1.msra.mxu0 0.0
        %458 = vmatprep.subr.mxu0 0.0
        %459 = vmatpush1.msra.mxu0 0.0
        %460 = vmatprep.subr.mxu0 0.0
        %461 = vmatpush1.msra.mxu0 0.0
        %462 = vmatprep.subr.mxu0 0.0
        %463 = vmatpush1.msra.mxu0 0.0
        %464 = vmatprep.subr.mxu0 0.0
        %465 = vmatpush1.msra.mxu0 0.0
        %466 = vmatprep.mubr.f32.mxu0 0.0
        %467 = vmatmul.mubr.f32.gmra.mrb[0].mxu0 %v400
        %v468 = vpop.f32.mrb[0].mxu0
        %v469 = vadd.f32 0.0, %v468
        %v470 = vpop.f32.mrb[0].mxu0
        %471 = vdwg.mxu0
        %v472 = vadd.f32 %v389, %v469
        %473 = vst.msk [vmem:[#allocation2] sm:$0xff] %vm310, %v472
        // Predicated region
        $region45: #{tpu_custom_call.1} parent=39 // pred_check
          %p474 = pneg %p285
        $region46: #{tpu_custom_call.1} parent=39 // pred_check_branch
          %476 = sbr.rel (%p474) target = $region48
        $region47: #{tpu_custom_call.1} parent=39 // pred_region
          %v477 = vld [vmem:[#allocation2] sm:$0xff]
          %478 = vst.msk [vmem:[%s267] sm:$0xff] %vm310, %v477
        $region48: #{tpu_custom_call.1} parent=39 // pred_fallthru
          _
        %s479 = sand.u32 %s164, 1
        %s480 = scalar_lea.sflag [#allocation4], %s479
        %s481 = sand.u32 %s164, 1
        %s482 = smul.addr %s481, 8
        %s483 = scalar_lea.vmem [#allocation3], %s482
        // Predicated region
        $region49: #{tpu_custom_call.1} parent=39 // pred_check
          %p484 = pneg %p174
        $region50: #{tpu_custom_call.1} parent=39 // pred_check_branch
          %486 = sbr.rel (%p484) target = $region52
        $region51: #{tpu_custom_call.1} parent=39 // pred_region
          %s488 = ssub.s32 128, 128
          %489 = vsyncadd %s480, %s488
          %s490 = smul.addr %s23, 128
          %s491 = scalar_lea.hbm %s5, %s490
          %s493 = sshll.u32 %s483, 4
          %s494 = int_to_ptr.vmem [resolvable:$true] %s493
          %496 = dma.vmem_to_hbm [thread:$0]  %s494, 128, %s491, %s480
        $region52: #{tpu_custom_call.1} parent=39 // pred_fallthru
          _
      $region40: #{tpu_custom_call.1} parent=5 // pred_fallthru
        _
      %p497 = scmp.le.s32.totalorder 2, %s14
      // Predicated region
      $region53: #{tpu_custom_call.1} parent=5 // pred_check
        %p498 = pneg %p497
      $region54: #{tpu_custom_call.1} parent=5 // pred_check_branch
        %500 = sbr.rel (%p498) target = $region56
      $region55: #{tpu_custom_call.1} parent=5 // pred_region
        %s501 = ssub.s32 %s14, 2
        // Predicated region
        $region57: #{tpu_custom_call.1} parent=55 // pred_check
          %p502 = pneg %p180
        $region58: #{tpu_custom_call.1} parent=55 // pred_check_branch
          %504 = sbr.rel (%p502) target = $region60
        $region59: #{tpu_custom_call.1} parent=55 // pred_region
          %s505 = sand.u32 %s165, 1
          %s506 = scalar_lea.sflag [#allocation4], %s505
          %s507 = sand.u32 %s165, 1
          %s508 = smul.addr %s507, 8
          %s509 = scalar_lea.vmem [#allocation3], %s508
          %510 = dma.done %s506, 128
        $region60: #{tpu_custom_call.1} parent=55 // pred_fallthru
          _
      $region56: #{tpu_custom_call.1} parent=5 // pred_fallthru
        _
    $region6: #{tpu_custom_call.1} parent=1 // loop_footer
      %s18 = sadd.s32 1, %s14
    $region7: #{tpu_custom_call.1} parent=1 // loop_footer_branch
      %13 = sbr.rel target = $region3
    $region8: #{tpu_custom_call.1} parent=1 // loop_exit
      _
    %511 = vsyncpa [#allocation4], 1
    %s512 = scalar_lea.sflag [#allocation4], 1
    %513 = vsyncpa %s512, 1

</llo_original>
